<compile_context>
chip_gen: v7x
topology: tpu7x:2x2x1
jax: 0.10.0
libtpu: 0.0.40
codegen_flags: <defaults>
</compile_context>

<pallas_src>
import jax
import jax.numpy as jnp
from jax.experimental import pallas as pl
from jax.experimental.pallas import tpu as pltpu

_LANE = 128
_SUBLANE = 8


def _round_up(a, m):
    return ((a + m - 1) // m) * m


def _edge_conv_kernel(x_i_ref, pj_ref, wc_ref, b_ref, o_ref, acc_ref):
    """Grid = (node_tiles, K); the neighbor axis j is the inner reduction axis."""
    j = pl.program_id(1)
    pj = pj_ref[0].astype(jnp.float32)                 # (tn, c_out_p) projected neighbors

    @pl.when(j == 0)
    def _():
        acc_ref[...] = pj                              # init running max

    @pl.when(j > 0)
    def _():
        acc_ref[...] = jnp.maximum(acc_ref[...], pj)   # running max over neighbors

    @pl.when(j == pl.num_programs(1) - 1)
    def _():
        # j-invariant center term, computed once per node tile on the MXU:
        #   x_i @ (W1 - W2) + b
        center = jnp.dot(x_i_ref[...], wc_ref[...],
                         preferred_element_type=jnp.float32) + b_ref[...]
        # relu(max_j(.) + center) == max_j(relu(. + center))   (exact, relu monotone)
        o_ref[...] = jnp.maximum(acc_ref[...] + center, 0.0).astype(o_ref.dtype)


def _vmem_capacity_bytes():
    try:
        return int(pltpu.get_tpu_info().vmem_capacity_bytes)
    except Exception:
        return 64 * 1024 * 1024        # conservative (v7x-sized) fallback


def edge_conv1d(x, edge_index, weight, bias, *, tile_n=None, vmem_budget_bytes=None):
    """EdgeConv1d / GraphConv1d(conv='edge') forward.

    x: (N, C_in) node features.
    edge_index: (2, N, K) int32; edge_index[0][n, j] = j-th neighbor of node n,
                index == N selects the 1e6 sentinel row.
    weight: (2*C_in, C_out)  1x1 Conv1d kernel, transposed for x @ W.
    bias:   (C_out,).
    Returns (N, C_out).
    """
    n, c_in = x.shape
    k = int(edge_index.shape[-1])
    c_out = weight.shape[-1]
    dtype = x.dtype
    bytes_el = jnp.dtype(dtype).itemsize

    cout_p = _round_up(c_out, _LANE)        # lane-dense output / full MXU N dim

    # ---- fold (x_j - x_i) into the weights (exact) ---------------------------
    #   out = relu( max_j(x_j @ W2) + x_i @ (W1 - W2) + b )
    w1 = weight[:c_in].astype(jnp.float32)
    w2 = weight[c_in:].astype(jnp.float32)
    w_center = jnp.zeros((c_in, cout_p), dtype).at[:, :c_out].set(
        (w1 - w2).astype(dtype))
    b_pad = jnp.zeros((1, cout_p), jnp.float32).at[:, :c_out].set(
        bias.astype(jnp.float32))

    # ---- pre-project neighbors BEFORE the gather ------------------------------
    # One (N+1, C_in) @ (C_in, C_out) matmul instead of K of them, and the gathered
    # tensor shrinks to C_out(padded) channels.
    s_pts = jnp.concatenate([x, jnp.full((1, c_in), 1e6, dtype)], axis=0)
    p_tbl = jnp.dot(s_pts.astype(jnp.float32), w2,
                    preferred_element_type=jnp.float32)              # (N+1, C_out)
    p_tbl = jnp.zeros((n + 1, cout_p), jnp.float32).at[:, :c_out].set(p_tbl)
    p_tbl = p_tbl.astype(dtype)

    # ---- VMEM-aware node-tile sizing ------------------------------------------
    def tile_bytes(t):
        xi = 2 * t * c_in * bytes_el          # double-buffered x_i tile
        pj = 2 * t * cout_p * bytes_el        # double-buffered projected-neighbor block
        oo = 2 * t * cout_p * bytes_el        # double-buffered output tile
        acc = t * cout_p * 4                  # f32 running-max scratch
        wts = 2 * c_in * cout_p * bytes_el    # resident W_center (still double-buffered)
        bia = 2 * cout_p * 4                  # bias
        return xi + pj + oo + acc + wts + bia

    vmem_cap = _vmem_capacity_bytes()
    if vmem_budget_bytes is None:
        # ~44 MiB on 128 MiB chips (v5e/v6e), ~28 MiB on v7x (64 MiB VMEM).
        vmem_budget_bytes = min(vmem_cap // 2, 48 * 1024 * 1024) - 4 * 1024 * 1024

    tn = _round_up(n, _SUBLANE) if tile_n is None else _round_up(tile_n, _SUBLANE)
    tn = min(tn, _round_up(n, _SUBLANE), 4096)
    while tn > _SUBLANE and tile_bytes(tn) > vmem_budget_bytes:
        tn -= _SUBLANE
    # Keep >= ~4 node-grid steps so both v7x TensorCores get work (harmless on 1-TC chips).
    tn = max(_SUBLANE, min(tn, _round_up(max(1, -(-n // 4)), _SUBLANE)))

    n_pad = _round_up(n, tn)

    # ---- pad node axis and gather the projected table (XLA glue) --------------
    if n_pad != n:
        x_p = jnp.concatenate([x, jnp.zeros((n_pad - n, c_in), dtype)], axis=0)
    else:
        x_p = x
    idx = edge_index[0].T.astype(jnp.int32)                      # (K, N) neighbor-major
    if n_pad != n:
        idx = jnp.pad(idx, ((0, 0), (0, n_pad - n)))             # padded rows read row 0
    # TODO(synk): data-dependent row gather stays as XLA glue (no reliable vectorized
    # Pallas-TPU gather lowering at these shapes); it now only moves C_out-wide rows.
    p_j = p_tbl[idx]                                             # (K, n_pad, cout_p)

    grid = (n_pad // tn, k)
    vmem_limit = int(min(vmem_cap - 4 * 1024 * 1024,
                         max(tile_bytes(tn) + 8 * 1024 * 1024, 32 * 1024 * 1024)))

    out = pl.pallas_call(
        _edge_conv_kernel,
        out_shape=jax.ShapeDtypeStruct((n_pad, cout_p), dtype),
        grid_spec=pltpu.PrefetchScalarGridSpec(
            num_scalar_prefetch=0,
            grid=grid,
            in_specs=[
                pl.BlockSpec((tn, c_in), lambda i, j: (i, 0)),          # x_i tile (reused over j)
                pl.BlockSpec((1, tn, cout_p), lambda i, j: (j, i, 0)),  # projected neighbor block
                pl.BlockSpec((c_in, cout_p), lambda i, j: (0, 0)),      # W_center (resident)
                pl.BlockSpec((1, cout_p), lambda i, j: (0, 0)),         # bias (resident)
            ],
            out_specs=pl.BlockSpec((tn, cout_p), lambda i, j: (i, 0)),
            scratch_shapes=[pltpu.VMEM((tn, cout_p), jnp.float32)],
        ),
        compiler_params=pltpu.CompilerParams(
            dimension_semantics=("parallel", "arbitrary"),
            vmem_limit_bytes=vmem_limit,
        ),
    )(x_p, p_j, w_center, b_pad)

    return out[:n, :c_out]


def edge_conv1d_reference(x, edge_index, weight, bias):
    """Pure-JAX reference mirroring the PyTorch forward exactly."""
    n, c_in = x.shape
    s_pts = jnp.concatenate([x, jnp.full((1, c_in), 1e6, x.dtype)], axis=0)
    x_j = s_pts[edge_index[0]]                                   # (N, K, C_in)
    x_i = jnp.broadcast_to(x[:, None, :], x_j.shape)             # get_center_feature
    feat = jnp.concatenate([x_i, x_j - x_i], axis=-1)            # (N, K, 2*C_in)
    out = jnp.einsum("nkc,cd->nkd", feat, weight) + bias         # 1x1 Conv1d
    out = jnp.maximum(out, 0.0)                                  # relu (norm=None)
    return jnp.max(out, axis=1)                                  # max aggregation


if __name__ == "__main__":
    N, C_IN, C_OUT, K = 16, 4, 8, 9

    key = jax.random.PRNGKey(0)
    kx, ke, kw, kb = jax.random.split(key, 4)

    x = jax.random.normal(kx, (N, C_IN), dtype=jnp.float32)
    # neighbor indices in [0, N]; index N hits the 1e6 sentinel row
    edge_index = jax.random.randint(ke, (2, N, K), 0, N + 1, dtype=jnp.int32)
    # synthetic Conv1d(2*C_in -> C_out, kernel=1, bias=True) parameters
    weight = jax.random.normal(kw, (2 * C_IN, C_OUT), dtype=jnp.float32) * 0.1
    bias = jax.random.normal(kb, (C_OUT,), dtype=jnp.float32) * 0.1

    out = edge_conv1d(x, edge_index, weight, bias)
    out = jax.block_until_ready(out)

    ref = edge_conv1d_reference(x, edge_index, weight, bias)
    assert out.shape == (N, C_OUT), out.shape
    assert jnp.allclose(out, ref, rtol=1e-4, atol=1e-3), (out, ref)

    print("KERNEL_OK")
</pallas_src>

<mosaic_0001>
module attributes {stable_mosaic.version = 11 : i64} {
  func.func @_edge_conv_kernel(%arg0: i32, %arg1: i32, %arg2: memref<8x4xf32, #tpu.memory_space<vmem>>, %arg3: memref<1x8x128xf32, #tpu.memory_space<vmem>>, %arg4: memref<4x128xf32, #tpu.memory_space<vmem>>, %arg5: memref<1x128xf32, #tpu.memory_space<vmem>>, %arg6: memref<8x128xf32, #tpu.memory_space<vmem>>, %arg7: memref<8x128xf32, #tpu.memory_space<vmem>>) attributes {dimension_semantics = [#tpu.dimension_semantics<parallel>, #tpu.dimension_semantics<arbitrary>], iteration_bounds = array<i64: 2, 9>, scalar_prefetch = 0 : i64, scratch_operands = 1 : i64, tpu.core_type = #tpu.core_type<tc>, window_params = [{transform_indices = @transform_0, window_bounds = array<i64: 8, 4>}, {transform_indices = @transform_1, window_bounds = array<i64: 1, 8, 128>}, {pipeline_mode = #tpu.pipeline_mode<synchronous>, transform_indices = @transform_2, window_bounds = array<i64: 4, 128>}, {pipeline_mode = #tpu.pipeline_mode<synchronous>, transform_indices = @transform_3, window_bounds = array<i64: 1, 128>}, {transform_indices = @transform_4, window_bounds = array<i64: 8, 128>}]} {
    %c0 = arith.constant 0 : index
    %c0_0 = arith.constant 0 : index
    %c0_1 = arith.constant 0 : index
    %0 = vector.load %arg3[%c0, %c0_0, %c0_1] : memref<1x8x128xf32, #tpu.memory_space<vmem>>, vector<1x8x128xf32>
    %1 = vector.shape_cast %0 : vector<1x8x128xf32> to vector<8x128xf32>
    %c0_i32 = arith.constant 0 : i32
    %2 = arith.cmpi eq, %arg1, %c0_i32 : i32
    %3 = arith.extui %2 : i1 to i32
    %c0_i32_2 = arith.constant 0 : i32
    %4 = arith.cmpi ne, %3, %c0_i32_2 : i32
    scf.if %4 {
      %c0_6 = arith.constant 0 : index
      %c0_7 = arith.constant 0 : index
      %11 = vector.load %arg7[%c0_6, %c0_7] : memref<8x128xf32, #tpu.memory_space<vmem>>, vector<8x128xf32>
      tpu.vector_store %arg7[%c0_6, %c0_7], %1 {strides = array<i32>} : memref<8x128xf32, #tpu.memory_space<vmem>>, vector<8x128xf32>,
    } else {
    }
    %c0_i32_3 = arith.constant 0 : i32
    %5 = arith.cmpi sgt, %arg1, %c0_i32_3 : i32
    %6 = arith.extui %5 : i1 to i32
    %c0_i32_4 = arith.constant 0 : i32
    %7 = arith.cmpi ne, %6, %c0_i32_4 : i32
    scf.if %7 {
      %c0_6 = arith.constant 0 : index
      %c0_7 = arith.constant 0 : index
      %11 = vector.load %arg7[%c0_6, %c0_7] : memref<8x128xf32, #tpu.memory_space<vmem>>, vector<8x128xf32>
      %12 = arith.maximumf %11, %1 : vector<8x128xf32>
      %c0_8 = arith.constant 0 : index
      %c0_9 = arith.constant 0 : index
      %13 = vector.load %arg7[%c0_8, %c0_9] : memref<8x128xf32, #tpu.memory_space<vmem>>, vector<8x128xf32>
      tpu.vector_store %arg7[%c0_8, %c0_9], %12 {strides = array<i32>} : memref<8x128xf32, #tpu.memory_space<vmem>>, vector<8x128xf32>,
    } else {
    }
    %c8_i32 = arith.constant 8 : i32
    %8 = arith.cmpi eq, %arg1, %c8_i32 : i32
    %9 = arith.extui %8 : i1 to i32
    %c0_i32_5 = arith.constant 0 : i32
    %10 = arith.cmpi ne, %9, %c0_i32_5 : i32
    scf.if %10 {
      %c0_6 = arith.constant 0 : index
      %c0_7 = arith.constant 0 : index
      %11 = vector.load %arg2[%c0_6, %c0_7] : memref<8x4xf32, #tpu.memory_space<vmem>>, vector<8x4xf32>
      %c0_8 = arith.constant 0 : index
      %c0_9 = arith.constant 0 : index
      %12 = vector.load %arg4[%c0_8, %c0_9] : memref<4x128xf32, #tpu.memory_space<vmem>>, vector<4x128xf32>
      %cst = arith.constant dense<0.000000e+00> : vector<8x128xf32>
      %13 = tpu.matmul %11, %12, %cst {dimension_numbers = #tpu.dot_dimension_numbers<[1], [0], [0], [1], [0, 0, 1, 1], [], []>} : vector<8x4xf32>, vector<4x128xf32>, vector<8x128xf32> -> vector<8x128xf32>
      %c0_10 = arith.constant 0 : index
      %c0_11 = arith.constant 0 : index
      %14 = vector.load %arg5[%c0_10, %c0_11] : memref<1x128xf32, #tpu.memory_space<vmem>>, vector<1x128xf32>
      %15 = vector.broadcast %14 : vector<1x128xf32> to vector<8x128xf32>
      %16 = arith.addf %13, %15 : vector<8x128xf32>
      %c0_12 = arith.constant 0 : index
      %c0_13 = arith.constant 0 : index
      %17 = vector.load %arg7[%c0_12, %c0_13] : memref<8x128xf32, #tpu.memory_space<vmem>>, vector<8x128xf32>
      %18 = arith.addf %17, %16 : vector<8x128xf32>
      %cst_14 = arith.constant 0.000000e+00 : f32
      %19 = vector.broadcast %cst_14 : f32 to vector<8x128xf32>
      %20 = arith.maximumf %18, %19 : vector<8x128xf32>
      %c0_15 = arith.constant 0 : index
      %c0_16 = arith.constant 0 : index
      %21 = vector.load %arg6[%c0_15, %c0_16] : memref<8x128xf32, #tpu.memory_space<vmem>>, vector<8x128xf32>
      tpu.vector_store %arg6[%c0_15, %c0_16], %20 {strides = array<i32>} : memref<8x128xf32, #tpu.memory_space<vmem>>, vector<8x128xf32>,
    } else {
    }
    return
  }
  func.func @transform_0(%arg0: i32, %arg1: i32) -> (i32, i32) {
    %c0_i32 = arith.constant 0 : i32
    %c0_i32_0 = arith.constant 0 : i32
    return %arg0, %c0_i32 : i32, i32
  }
  func.func @transform_1(%arg0: i32, %arg1: i32) -> (i32, i32, i32) {
    %c0_i32 = arith.constant 0 : i32
    %c0_i32_0 = arith.constant 0 : i32
    return %arg1, %arg0, %c0_i32 : i32, i32, i32
  }
  func.func @transform_2(%arg0: i32, %arg1: i32) -> (i32, i32) {
    %c0_i32 = arith.constant 0 : i32
    %c0_i32_0 = arith.constant 0 : i32
    %c0_i32_1 = arith.constant 0 : i32
    return %c0_i32, %c0_i32_0 : i32, i32
  }
  func.func @transform_3(%arg0: i32, %arg1: i32) -> (i32, i32) {
    %c0_i32 = arith.constant 0 : i32
    %c0_i32_0 = arith.constant 0 : i32
    %c0_i32_1 = arith.constant 0 : i32
    return %c0_i32, %c0_i32_0 : i32, i32
  }
  func.func @transform_4(%arg0: i32, %arg1: i32) -> (i32, i32) {
    %c0_i32 = arith.constant 0 : i32
    %c0_i32_0 = arith.constant 0 : i32
    return %arg0, %c0_i32 : i32, i32
  }
}

</mosaic_0001>

<llo_original>
// kernel: tpu_custom_call.1
$region0: #{tpu_custom_call.1}
  #allocation0 [shape = 'u32[]', space=smem, size = 0x4, offset = 0x4, fixed_abs, tag = 'smem constant byte address 0x4 - core index']
  #allocation1 [shape = 'u32[144,128]{1,0:T(1,128)}', space=vmem, size = 0x12000, scoped, tag = 'internal scratch']
  #allocation2 [shape = 'f32[8,128]{1,0:T(8,128)}', space=vmem, size = 0x1000, scoped, tag = 'scratch operand']
  %s0 = inlined_call_operand.vmem [shape: f32[16,4], index: 0, kind: input, shape index: {}]
  %s1 = inlined_call_operand.hbm [shape: f32[9,16,128], index: 1, kind: input, shape index: {}]
  %s2 = inlined_call_operand.vmem [shape: f32[4,128], index: 2, kind: input, shape index: {}]
  %s3 = inlined_call_operand.vmem [shape: f32[1,128], index: 3, kind: input, shape index: {}]
  %s4 = inlined_call_operand.hbm [shape: f32[16,128], index: 4, kind: output, shape index: {}]
  %s5 = sld [smem:[#allocation0]]
  $region65: #{tpu_custom_call.1} parent=0
    _
  %s7 = ssub.s32 1, %s5
  %s8 = scalar_select 0, %s7, %s5
  $region1: #{tpu_custom_call.1} parent=0
    #allocation3 [shape = 'u8[8192]{0}', space=vmem, size = 0x2000, scoped, tag = 'input window, operand 1']
    #allocation4 [shape = 's32[2]{0}', space=sflag, size = 0x8, scoped, tag = 'scoped memory for tpu_custom_call.1']
    #allocation5 [shape = 's32[2]{0}', space=sflag, size = 0x8, scoped, tag = 'scoped memory for tpu_custom_call.1']
    #allocation6 [shape = 'u8[8192]{0}', space=vmem, size = 0x2000, scoped, tag = 'output window, operand 0']
    %9 = vsyncpa [#allocation4], 0
    %s10 = scalar_lea.sflag [#allocation4], 1
    %11 = vsyncpa %s10, 0
    %12 = vsyncpa [#allocation5], 0
    %s13 = scalar_lea.sflag [#allocation5], 1
    %14 = vsyncpa %s13, 0
    loop: start=0, step=1, limit=20
    $region2: #{tpu_custom_call.1} parent=1 // loop_pre_header
      _
    $region3: #{tpu_custom_call.1} parent=1 // loop_header
      %s16 = sphi 0, %s20
      %p17 = scmp.ge.s32.totalorder %s16, 20
      %s23 = sphi 0, %s35
      %s24 = sphi 0, %s31
      %s25 = sphi 0, %s23
      %s26 = sphi 0, %s24
      %s27 = sphi 0, %s25
      %s28 = sphi 0, %s26
      %s38 = sphi 0, %s40
      %s41 = sphi 0, %s38
      %s42 = sphi 0, %s41
      %s58 = sphi 0, %s42
      %s66 = sphi 0, %s68
      %s69 = sphi 0, %s66
      %s70 = sphi 0, %s69
      %s86 = sphi 0, %s70
      %s90 = sphi 0, %s90
      %s92 = sphi 0, %s90
      %s93 = sphi 0, %s92
      %s107 = sphi 0, %s93
      %s111 = sphi 0, %s111
      %s113 = sphi 0, %s111
      %s114 = sphi 0, %s113
      %s128 = sphi 0, %s114
      %s134 = sphi 0, %s136
      %s137 = sphi 0, %s134
      %s138 = sphi 0, %s137
      %s154 = sphi 0, %s138
    $region4: #{tpu_custom_call.1} parent=1 // loop_header_branch
      %19 = sbr.rel (%p17) target = $region8
    $region5: #{tpu_custom_call.1} parent=1 // loop_body
      %s21 = ssub.s32 %s16, 1
      %s22 = ssub.s32 %s16, 2
      %s29 = sadd.s32 1, %s24
      %p30 = scmp.ge.s32.totalorder %s29, 9
      %s31 = scalar_select %p30, 0, %s29
      %s32 = sadd.s32 1, %s23
      %s33 = scalar_select %p30, %s32, %s23
      %p34 = scmp.ge.s32.totalorder %s33, 2
      %s35 = scalar_select %p34, 0, %s33
      %s36 = ssub.s32 %s23, %s35
      %p37 = scmp.eq.s32.totalorder %s36, 0
      %s39 = sadd.s32 %s38, 1
      %s40 = scalar_select %p37, %s38, %s39
      %p43 = pneg %p37
      %p44 = scmp.eq.s32.totalorder %s16, 17
      %p45 = por %p43, %p44
      %p46 = scmp.ne.s32.totalorder %s38, %s41
      %p47 = scmp.eq.s32.totalorder %s16, 0
      %p48 = por %p46, %p47
      %p49 = scmp.ne.s32.totalorder %s38, %s41
      %p50 = scmp.eq.s32.totalorder %s21, 17
      %p51 = por %p49, %p50
      %p52 = scmp.ne.s32.totalorder %s41, %s42
      %p53 = scmp.eq.s32.totalorder %s21, 0
      %p54 = por %p52, %p53
      %p55 = scmp.ne.s32.totalorder %s41, %s42
      %p56 = scmp.eq.s32.totalorder %s22, 17
      %p57 = por %p55, %p56
      %p59 = scmp.ne.s32.totalorder %s42, %s58
      %p60 = scmp.eq.s32.totalorder %s22, 0
      %p61 = por %p59, %p60
      %s62 = ssub.s32 %s24, %s31
      %s63 = ssub.s32 %s23, %s35
      %s64 = sor.u32 %s62, %s63
      %p65 = scmp.eq.s32.totalorder %s64, 0
      %s67 = sadd.s32 %s66, 1
      %s68 = scalar_select %p65, %s66, %s67
      %p71 = pneg %p65
      %p72 = scmp.eq.s32.totalorder %s16, 17
      %p73 = por %p71, %p72
      %p74 = scmp.ne.s32.totalorder %s66, %s69
      %p75 = scmp.eq.s32.totalorder %s16, 0
      %p76 = por %p74, %p75
      %p77 = scmp.ne.s32.totalorder %s66, %s69
      %p78 = scmp.eq.s32.totalorder %s21, 17
      %p79 = por %p77, %p78
      %p80 = scmp.ne.s32.totalorder %s69, %s70
      %p81 = scmp.eq.s32.totalorder %s21, 0
      %p82 = por %p80, %p81
      %p83 = scmp.ne.s32.totalorder %s69, %s70
      %p84 = scmp.eq.s32.totalorder %s22, 17
      %p85 = por %p83, %p84
      %p87 = scmp.ne.s32.totalorder %s70, %s86
      %p88 = scmp.eq.s32.totalorder %s22, 0
      %p89 = por %p87, %p88
      %s91 = sadd.s32 %s90, 1
      %p94 = scmp.eq.s32.totalorder %s16, 17
      %p95 = scmp.ne.s32.totalorder %s90, %s92
      %p96 = scmp.eq.s32.totalorder %s16, 0
      %p97 = por %p95, %p96
      %p98 = scmp.ne.s32.totalorder %s90, %s92
      %p99 = scmp.eq.s32.totalorder %s21, 17
      %p100 = por %p98, %p99
      %p101 = scmp.ne.s32.totalorder %s92, %s93
      %p102 = scmp.eq.s32.totalorder %s21, 0
      %p103 = por %p101, %p102
      %p104 = scmp.ne.s32.totalorder %s92, %s93
      %p105 = scmp.eq.s32.totalorder %s22, 17
      %p106 = por %p104, %p105
      %p108 = scmp.ne.s32.totalorder %s93, %s107
      %p109 = scmp.eq.s32.totalorder %s22, 0
      %p110 = por %p108, %p109
      %s112 = sadd.s32 %s111, 1
      %p115 = scmp.eq.s32.totalorder %s16, 17
      %p116 = scmp.ne.s32.totalorder %s111, %s113
      %p117 = scmp.eq.s32.totalorder %s16, 0
      %p118 = por %p116, %p117
      %p119 = scmp.ne.s32.totalorder %s111, %s113
      %p120 = scmp.eq.s32.totalorder %s21, 17
      %p121 = por %p119, %p120
      %p122 = scmp.ne.s32.totalorder %s113, %s114
      %p123 = scmp.eq.s32.totalorder %s21, 0
      %p124 = por %p122, %p123
      %p125 = scmp.ne.s32.totalorder %s113, %s114
      %p126 = scmp.eq.s32.totalorder %s22, 17
      %p127 = por %p125, %p126
      %p129 = scmp.ne.s32.totalorder %s114, %s128
      %p130 = scmp.eq.s32.totalorder %s22, 0
      %p131 = por %p129, %p130
      %s132 = ssub.s32 %s23, %s35
      %p133 = scmp.eq.s32.totalorder %s132, 0
      %s135 = sadd.s32 %s134, 1
      %s136 = scalar_select %p133, %s134, %s135
      %p139 = pneg %p133
      %p140 = scmp.eq.s32.totalorder %s16, 17
      %p141 = por %p139, %p140
      %p142 = scmp.ne.s32.totalorder %s134, %s137
      %p143 = scmp.eq.s32.totalorder %s16, 0
      %p144 = por %p142, %p143
      %p145 = scmp.ne.s32.totalorder %s134, %s137
      %p146 = scmp.eq.s32.totalorder %s21, 17
      %p147 = por %p145, %p146
      %p148 = scmp.ne.s32.totalorder %s137, %s138
      %p149 = scmp.eq.s32.totalorder %s21, 0
      %p150 = por %p148, %p149
      %p151 = scmp.ne.s32.totalorder %s137, %s138
      %p152 = scmp.eq.s32.totalorder %s22, 17
      %p153 = por %p151, %p152
      %p155 = scmp.ne.s32.totalorder %s138, %s154
      %p156 = scmp.eq.s32.totalorder %s22, 0
      %p157 = por %p155, %p156
      %p158 = scmp.le.s32.totalorder 1, %s16
      %p159 = scmp.lt.s32.totalorder %s16, 19
      %p160 = pnand %p158, %p159
      %p161 = pneg %p160
      // Predicated region
      $region9: #{tpu_custom_call.1} parent=5 // pred_check
        _
      $region10: #{tpu_custom_call.1} parent=5 // pred_check_branch
        %163 = sbr.rel (%p160) target = $region12
      $region11: #{tpu_custom_call.1} parent=5 // pred_region
        %s164 = ssub.s32 %s16, 1
        // Predicated region
        $region13: #{tpu_custom_call.1} parent=11 // pred_check
          %p165 = pneg %p103
        $region14: #{tpu_custom_call.1} parent=11 // pred_check_branch
          %167 = sbr.rel (%p165) target = $region16
        $region15: #{tpu_custom_call.1} parent=11 // pred_region
          _
        $region16: #{tpu_custom_call.1} parent=11 // pred_fallthru
          _
        // Predicated region
        $region17: #{tpu_custom_call.1} parent=11 // pred_check
          %p168 = pneg %p124
        $region18: #{tpu_custom_call.1} parent=11 // pred_check_branch
          %170 = sbr.rel (%p168) target = $region20
        $region19: #{tpu_custom_call.1} parent=11 // pred_region
          _
        $region20: #{tpu_custom_call.1} parent=11 // pred_fallthru
          _
      $region12: #{tpu_custom_call.1} parent=5 // pred_fallthru
        _
      %p171 = scmp.lt.s32.totalorder %s16, 18
      // Predicated region
      $region21: #{tpu_custom_call.1} parent=5 // pred_check
        %p172 = pneg %p171
      $region22: #{tpu_custom_call.1} parent=5 // pred_check_branch
        %174 = sbr.rel (%p172) target = $region24
      $region23: #{tpu_custom_call.1} parent=5 // pred_region
        // Predicated region
        $region25: #{tpu_custom_call.1} parent=23 // pred_check
          %p175 = pneg %p48
        $region26: #{tpu_custom_call.1} parent=23 // pred_check_branch
          %177 = sbr.rel (%p175) target = $region28
        $region27: #{tpu_custom_call.1} parent=23 // pred_region
          %p178 = scmp.lt.s32.totalorder %s23, 1
          %s179 = scalar_select %p178, %s23, 1
          %s180 = smul.addr %s179, 8
          %s181 = scalar_lea.vmem %s0, %s180
        $region28: #{tpu_custom_call.1} parent=23 // pred_fallthru
          _
        // Predicated region
        $region29: #{tpu_custom_call.1} parent=23 // pred_check
          %p182 = pneg %p76
        $region30: #{tpu_custom_call.1} parent=23 // pred_check_branch
          %184 = sbr.rel (%p182) target = $region32
        $region31: #{tpu_custom_call.1} parent=23 // pred_region
          %s185 = sand.u32 %s66, 1
          %s186 = scalar_lea.sflag [#allocation4], %s185
          %s187 = sand.u32 %s66, 1
          %s188 = smul.addr %s187, 8
          %s189 = scalar_lea.vmem [#allocation3], %s188
          %s191 = ssub.s32 128, 128
          %192 = vsyncadd %s186, %s191
          %s193 = smul.addr %s24, 2
          %s194 = sadd.s32 %s23, %s193
          %s195 = smul.addr %s194, 128
          %s196 = scalar_lea.hbm %s1, %s195
          %s198 = sshll.u32 %s189, 4
          %s199 = int_to_ptr.vmem [resolvable:$true] %s198
          %201 = dma.hbm_to_vmem [thread:$0]  %s196, 128, %s199, %s186
        $region32: #{tpu_custom_call.1} parent=23 // pred_fallthru
          _
      $region24: #{tpu_custom_call.1} parent=5 // pred_fallthru
        _
      %p202 = scmp.le.s32.totalorder 1, %s16
      %p203 = scmp.lt.s32.totalorder %s16, 19
      %p204 = pnand %p202, %p203
      %p205 = pneg %p204
      // Predicated region
      $region33: #{tpu_custom_call.1} parent=5 // pred_check
        _
      $region34: #{tpu_custom_call.1} parent=5 // pred_check_branch
        %207 = sbr.rel (%p204) target = $region36
      $region35: #{tpu_custom_call.1} parent=5 // pred_region
        %s208 = ssub.s32 %s16, 1
        %s209 = sand.u32 %s69, 1
        %s210 = scalar_lea.sflag [#allocation4], %s209
        %s211 = sand.u32 %s69, 1
        %s212 = smul.addr %s211, 8
        %s213 = scalar_lea.vmem [#allocation3], %s212
        // Predicated region
        $region37: #{tpu_custom_call.1} parent=35 // pred_check
          %p214 = pneg %p82
        $region38: #{tpu_custom_call.1} parent=35 // pred_check_branch
          %216 = sbr.rel (%p214) target = $region40
        $region39: #{tpu_custom_call.1} parent=35 // pred_region
          %217 = dma.done %s210, 128
        $region40: #{tpu_custom_call.1} parent=35 // pred_fallthru
          _
        %p218 = scmp.lt.s32.totalorder %s25, 1
        %s219 = scalar_select %p218, %s25, 1
        %s220 = smul.addr %s219, 8
        %s221 = scalar_lea.vmem %s0, %s220
        %p222 = pneg %p54
        %p223 = pneg %p51
        %s224 = sand.u32 %s69, 1
        %s225 = scalar_lea.sflag [#allocation4], %s224
        %s226 = sand.u32 %s69, 1
        %s227 = smul.addr %s226, 8
        %s228 = scalar_lea.vmem [#allocation3], %s227
        %p229 = pneg %p82
        %p230 = pneg %p79
        %p231 = pneg %p103
        %p232 = pneg %p100
        %p233 = pneg %p124
        %p234 = pneg %p121
        %p235 = pneg %p150
        %p236 = pneg %p147
        %s237 = sand.u32 %s137, 1
        %s238 = scalar_lea.sflag [#allocation5], %s237
        %s239 = sand.u32 %s137, 1
        %s240 = smul.addr %s239, 8
        %s241 = scalar_lea.vmem [#allocation6], %s240
        %p242 = scmp.lt.s32.totalorder %s25, 1
        %s243 = scalar_select %p242, %s25, 1
        %s244 = smul.addr %s243, 8
        %s245 = scalar_lea.vmem %s0, %s244
        %v246 = vld [vmem:[%s213] sm:$0xff]
        %p247 = scmp.eq.s32.totalorder %s26, 0
        // Predicated region
        $region41: #{tpu_custom_call.1} parent=35 // pred_check
          %p248 = pneg %p247
        $region42: #{tpu_custom_call.1} parent=35 // pred_check_branch
          %250 = sbr.rel (%p248) target = $region44
        $region43: #{tpu_custom_call.1} parent=35 // pred_region
          %251 = vst [vmem:[#allocation2] sm:$0xff] %v246
        $region44: #{tpu_custom_call.1} parent=35 // pred_fallthru
          _
        %p252 = scmp.gt.s32.totalorder %s26, 0
        // Predicated region
        $region45: #{tpu_custom_call.1} parent=35 // pred_check
          %p253 = pneg %p252
        $region46: #{tpu_custom_call.1} parent=35 // pred_check_branch
          %255 = sbr.rel (%p253) target = $region48
        $region47: #{tpu_custom_call.1} parent=35 // pred_region
          %v256 = vld [vmem:[#allocation2] sm:$0xff]
          %v257 = vmax.f32 %v256, %v246
          %258 = vst [vmem:[#allocation2] sm:$0xff] %v257
        $region48: #{tpu_custom_call.1} parent=35 // pred_fallthru
          _
        %p259 = scmp.eq.s32.totalorder %s26, 8
        // Predicated region
        $region49: #{tpu_custom_call.1} parent=35 // pred_check
          %p260 = pneg %p259
        $region50: #{tpu_custom_call.1} parent=35 // pred_check_branch
          %262 = sbr.rel (%p260) target = $region52
        $region51: #{tpu_custom_call.1} parent=35 // pred_region
          %v263 = vld [vmem:[%s245] sm:$0xff]
          %v264 = vld [vmem:[%s2] sm:$0xf]
          %v265 = vld [vmem:[%s3] sm:$0x1]
          %v267 = vlaneseq
          %v268 = vshrl.u32 %v267, 7
          %v269 = vsub.s32 0, %v268
          %v270 = vrot.slane %v265, %v269
          %vm272 = vcmask 31744
          %v274 = vsel %vm272, %v263, 0
          %vm276 = vcmask 1043456
          %v278 = vsel %vm276, %v264, 0
          %280 = vmatprep.subr.mxu0 0.0
          %281 = vmatpush1.msra.mxu0 %v278
          %282 = vmatprep.subr.mxu0 0.0
          %283 = vmatpush1.msra.mxu0 0.0
          %284 = vmatprep.subr.mxu0 0.0
          %285 = vmatpush1.msra.mxu0 0.0
          %286 = vmatprep.subr.mxu0 0.0
          %287 = vmatpush1.msra.mxu0 0.0
          %288 = vmatprep.subr.mxu0 0.0
          %289 = vmatpush1.msra.mxu0 0.0
          %290 = vmatprep.subr.mxu0 0.0
          %291 = vmatpush1.msra.mxu0 0.0
          %292 = vmatprep.subr.mxu0 0.0
          %293 = vmatpush1.msra.mxu0 0.0
          %294 = vmatprep.subr.mxu0 0.0
          %295 = vmatpush1.msra.mxu0 0.0
          %296 = vmatprep.subr.mxu0 0.0
          %297 = vmatpush1.msra.mxu0 0.0
          %298 = vmatprep.subr.mxu0 0.0
          %299 = vmatpush1.msra.mxu0 0.0
          %300 = vmatprep.subr.mxu0 0.0
          %301 = vmatpush1.msra.mxu0 0.0
          %302 = vmatprep.subr.mxu0 0.0
          %303 = vmatpush1.msra.mxu0 0.0
          %304 = vmatprep.subr.mxu0 0.0
          %305 = vmatpush1.msra.mxu0 0.0
          %306 = vmatprep.subr.mxu0 0.0
          %307 = vmatpush1.msra.mxu0 0.0
          %308 = vmatprep.subr.mxu0 0.0
          %309 = vmatpush1.msra.mxu0 0.0
          %310 = vmatprep.subr.mxu0 0.0
          %311 = vmatpush1.msra.mxu0 0.0
          %312 = vmatprep.subr.mxu0 0.0
          %313 = vmatpush1.msra.mxu0 0.0
          %314 = vmatprep.subr.mxu0 0.0
          %315 = vmatpush1.msra.mxu0 0.0
          %316 = vmatprep.subr.mxu0 0.0
          %317 = vmatpush1.msra.mxu0 0.0
          %318 = vmatprep.subr.mxu0 0.0
          %319 = vmatpush1.msra.mxu0 0.0
          %320 = vmatprep.subr.mxu0 0.0
          %321 = vmatpush1.msra.mxu0 0.0
          %322 = vmatprep.subr.mxu0 0.0
          %323 = vmatpush1.msra.mxu0 0.0
          %324 = vmatprep.subr.mxu0 0.0
          %325 = vmatpush1.msra.mxu0 0.0
          %326 = vmatprep.subr.mxu0 0.0
          %327 = vmatpush1.msra.mxu0 0.0
          %328 = vmatprep.subr.mxu0 0.0
          %329 = vmatpush1.msra.mxu0 0.0
          %330 = vmatprep.subr.mxu0 0.0
          %331 = vmatpush1.msra.mxu0 0.0
          %332 = vmatprep.subr.mxu0 0.0
          %333 = vmatpush1.msra.mxu0 0.0
          %334 = vmatprep.subr.mxu0 0.0
          %335 = vmatpush1.msra.mxu0 0.0
          %336 = vmatprep.subr.mxu0 0.0
          %337 = vmatpush1.msra.mxu0 0.0
          %338 = vmatprep.subr.mxu0 0.0
          %339 = vmatpush1.msra.mxu0 0.0
          %340 = vmatprep.subr.mxu0 0.0
          %341 = vmatpush1.msra.mxu0 0.0
          %342 = vmatprep.subr.mxu0 0.0
          %343 = vmatpush1.msra.mxu0 0.0
          %344 = vmatprep.mubr.f32.mxu0 0.0
          %345 = vmatmul.mubr.f32.gmra.mrb[0].mxu0 %v274
          %v346 = vpop.f32.mrb[0].mxu0
          %v347 = vadd.f32 %v270, %v346
          %v348 = vpop.f32.mrb[0].mxu0
          %349 = vdwg.mxu0
          %v350 = vld [vmem:[#allocation2] sm:$0xff]
          %v351 = vadd.f32 %v350, %v347
          %v352 = vmax.f32 %v351, 0.0
          %353 = vst [vmem:[%s241] sm:$0xff] %v352
        $region52: #{tpu_custom_call.1} parent=35 // pred_fallthru
          _
        %s354 = sand.u32 %s137, 1
        %s355 = scalar_lea.sflag [#allocation5], %s354
        %s356 = sand.u32 %s137, 1
        %s357 = smul.addr %s356, 8
        %s358 = scalar_lea.vmem [#allocation6], %s357
        // Predicated region
        $region53: #{tpu_custom_call.1} parent=35 // pred_check
          %p359 = pneg %p147
        $region54: #{tpu_custom_call.1} parent=35 // pred_check_branch
          %361 = sbr.rel (%p359) target = $region56
        $region55: #{tpu_custom_call.1} parent=35 // pred_region
          %s363 = ssub.s32 128, 128
          %364 = vsyncadd %s355, %s363
          %s365 = smul.addr %s25, 128
          %s366 = scalar_lea.hbm %s4, %s365
          %s368 = sshll.u32 %s358, 4
          %s369 = int_to_ptr.vmem [resolvable:$true] %s368
          %371 = dma.vmem_to_hbm [thread:$0]  %s369, 128, %s366, %s355
        $region56: #{tpu_custom_call.1} parent=35 // pred_fallthru
          _
      $region36: #{tpu_custom_call.1} parent=5 // pred_fallthru
        _
      %p372 = scmp.le.s32.totalorder 2, %s16
      // Predicated region
      $region57: #{tpu_custom_call.1} parent=5 // pred_check
        %p373 = pneg %p372
      $region58: #{tpu_custom_call.1} parent=5 // pred_check_branch
        %375 = sbr.rel (%p373) target = $region60
      $region59: #{tpu_custom_call.1} parent=5 // pred_region
        %s376 = ssub.s32 %s16, 2
        // Predicated region
        $region61: #{tpu_custom_call.1} parent=59 // pred_check
          %p377 = pneg %p153
        $region62: #{tpu_custom_call.1} parent=59 // pred_check_branch
          %379 = sbr.rel (%p377) target = $region64
        $region63: #{tpu_custom_call.1} parent=59 // pred_region
          %s380 = sand.u32 %s138, 1
          %s381 = scalar_lea.sflag [#allocation5], %s380
          %s382 = sand.u32 %s138, 1
          %s383 = smul.addr %s382, 8
          %s384 = scalar_lea.vmem [#allocation6], %s383
          %385 = dma.done %s381, 128
        $region64: #{tpu_custom_call.1} parent=59 // pred_fallthru
          _
      $region60: #{tpu_custom_call.1} parent=5 // pred_fallthru
        _
    $region6: #{tpu_custom_call.1} parent=1 // loop_footer
      %s20 = sadd.s32 1, %s16
    $region7: #{tpu_custom_call.1} parent=1 // loop_footer_branch
      %15 = sbr.rel target = $region3
    $region8: #{tpu_custom_call.1} parent=1 // loop_exit
      _
    %386 = vsyncpa [#allocation4], 1
    %s387 = scalar_lea.sflag [#allocation4], 1
    %388 = vsyncpa %s387, 1
    %389 = vsyncpa [#allocation5], 1
    %s390 = scalar_lea.sflag [#allocation5], 1
    %391 = vsyncpa %s390, 1

</llo_original>
